<compile_context>
chip_gen: v6e
topology: v6e:2x2x1
jax: 0.10.0
libtpu: 0.0.40
codegen_flags: <defaults>
</compile_context>

<pallas_src>
import functools

import jax
import jax.numpy as jnp
from jax import lax
from jax.experimental import pallas as pl
from jax.experimental.pallas import tpu as pltpu

EPS = 1e-6  # Llama RMSNorm epsilon


def _fnorm_proj_kernel(x_ref, g_ref, w_ref, o_ref, xn_ref, *, row_chunk, n_chunks):
    """One (m, v) grid step.

    x_ref : (tile_m, H)       hidden-state row tile (original dtype)
    g_ref : (1, H)            RMSNorm gain (original dtype, applied with promotion)
    w_ref : (tile_v, H)       lm_head weight tile (original [V, H] layout, no transpose)
    o_ref : (tile_m, tile_v)  logits tile
    xn_ref: (tile_m, H)       VMEM scratch holding the normalized rows for this m-tile
    """
    v = pl.program_id(1)

    # RMSNorm once per m-tile (v == 0; v is innermost / "arbitrary"), reused for every
    # vocab tile.  Row-chunked so f32 temporaries stay ~2*row_chunk*H*4 bytes instead of a
    # full (tile_m, H) f32 cast — keeps large tile_m configs inside v7x's 64 MiB VMEM.
    @pl.when(v == 0)
    def _():
        g = g_ref[...]

        def norm_rows(r):
            xb = x_ref[pl.ds(r, row_chunk), :].astype(jnp.float32)
            var = jnp.mean(xb * xb, axis=-1, keepdims=True)
            xn = (xb * lax.rsqrt(var + EPS)).astype(x_ref.dtype)
            # Gain applied in its own dtype (promotes, matching HF LlamaRMSNorm), then cast
            # to the matmul input dtype held in the scratch.
            xn_ref[pl.ds(r, row_chunk), :] = (xn * g).astype(xn_ref.dtype)

        if n_chunks == 1:
            norm_rows(0)
        else:
            def body(c, carry):
                norm_rows(pl.multiple_of(c * row_chunk, row_chunk))
                return carry

            lax.fori_loop(0, n_chunks, body, 0)

    # Output projection (no bias): (tile_m, H) . (tile_v, H)^T on the MXU, f32 accumulate.
    o_ref[...] = lax.dot_general(
        xn_ref[...],
        w_ref[...],
        dimension_numbers=(((1,), (1,)), ((), ())),
        preferred_element_type=jnp.float32,
    ).astype(o_ref.dtype)


def _device_tile_defaults():
    """(tile_m, tile_v, vmem_limit_bytes) tuned per TPU generation.

    tile_m is sized so per-v-step arithmetic intensity (~tile_m flop per weight byte) clears
    the HBM/MXU crossover of each generation; tile_v=768 divides common vocabs (128256).
    """
    kind = ""
    try:
        kind = jax.devices()[0].device_kind.lower()
    except Exception:  # pragma: no cover - defensive; fall through to defaults
        pass
    if "v6" in kind:   # v6e: ~655 flop/B crossover, 128 MiB physical VMEM -> biggest m tile
        return 1024, 768, 96 << 20
    if "v7" in kind:   # v7x: ~310 flop/B crossover, only 64 MiB VMEM -> smaller m tile
        return 512, 768, 48 << 20
    if "v5" in kind:   # v5e: ~240 flop/B crossover; default scoped VMEM is only 16 MiB
        return 512, 768, 64 << 20
    return 512, 768, 64 << 20


def _pick_tile(n, preferred, mult):
    """Largest tile <= preferred that is a multiple of `mult` and divides n exactly.

    Falls back to the full dimension (always a legal block) or, as a last resort, to a
    padded size (returned as the second element)."""
    pref = min(preferred, n)
    t = (pref // mult) * mult
    while t >= mult:
        if n % t == 0:
            return t, n
        t -= mult
    if n <= preferred:
        return n, n                                   # full-dim block, always legal
    t = max(mult, (min(preferred, n) // mult) * mult)
    return t, pl.cdiv(n, t) * t                       # padded fallback


def fnorm_pipeline_layer(hidden_states, norm_weight, o_proj_weight, labels,
                         *, tile_m=None, tile_v=None, vmem_limit_bytes=None):
    """Equivalent of FNormPipelineLayer.forward.

    hidden_states: [B, S, H]
    norm_weight:   [H]      (RMSNorm gain)
    o_proj_weight: [V, H]   (PyTorch nn.Linear weight, out_features x in_features)
    labels:        passed through untouched
    returns (logits [B, S, V], labels)
    """
    B, S, H = hidden_states.shape
    V = o_proj_weight.shape[0]
    M = B * S

    auto_m, auto_v, auto_vmem = _device_tile_defaults()
    pref_m = auto_m if tile_m is None else tile_m
    pref_v = auto_v if tile_v is None else tile_v
    vmem_limit = auto_vmem if vmem_limit_bytes is None else vmem_limit_bytes

    # Megacore guard (v7x): keep at least 2 m-tiles when M is small so the "parallel" m axis
    # can still be sharded across both TensorCores.
    if M >= 16:
        pref_m = min(pref_m, max(8, (M // 2) // 8 * 8))

    tile_m_, Mp = _pick_tile(M, pref_m, 8)      # rows: multiples of 8 (sublane)
    tile_v_, Vp = _pick_tile(V, pref_v, 128)    # vocab: multiples of 128 (lane)

    # Row-chunk size for the bounded-f32 norm pass.
    row_chunk = tile_m_
    for c in (256, 128, 64, 32, 16, 8):
        if c <= tile_m_ and tile_m_ % c == 0:
            row_chunk = c
            break
    n_chunks = tile_m_ // row_chunk

    xn_dtype = jnp.result_type(hidden_states.dtype, norm_weight.dtype)
    out_dtype = jnp.result_type(xn_dtype, o_proj_weight.dtype)

    x2d = hidden_states.reshape(M, H)
    if Mp != M:
        x2d = jnp.pad(x2d, ((0, Mp - M), (0, 0)))
    g2d = norm_weight.reshape(1, H)
    w = o_proj_weight
    if Vp != V:
        # TODO(synk): in production keep the lm_head weight pre-padded outside the step (or
        # pick a vocab that tiles exactly) so this V*H HBM copy never runs per call.
        w = jnp.pad(w, ((0, Vp - V), (0, 0)))

    grid = (Mp // tile_m_, Vp // tile_v_)

    kernel = functools.partial(_fnorm_proj_kernel, row_chunk=row_chunk, n_chunks=n_chunks)

    bytes_accessed = (
        x2d.size * x2d.dtype.itemsize
        + g2d.size * g2d.dtype.itemsize
        + w.size * w.dtype.itemsize
        + Mp * Vp * jnp.dtype(out_dtype).itemsize
    )
    cost = pl.CostEstimate(
        flops=2 * Mp * Vp * H,
        transcendentals=Mp,                 # one rsqrt per row
        bytes_accessed=bytes_accessed,
    )

    logits2d = pl.pallas_call(
        kernel,
        out_shape=jax.ShapeDtypeStruct((Mp, Vp), out_dtype),
        grid_spec=pltpu.PrefetchScalarGridSpec(
            num_scalar_prefetch=0,
            grid=grid,
            in_specs=[
                pl.BlockSpec((tile_m_, H), lambda m, v: (m, 0)),   # activation row tile
                pl.BlockSpec((1, H), lambda m, v: (0, 0)),         # norm gain (resident)
                pl.BlockSpec((tile_v_, H), lambda m, v: (v, 0)),   # weight tile, [V, H] layout
            ],
            out_specs=pl.BlockSpec((tile_m_, tile_v_), lambda m, v: (m, v)),
            scratch_shapes=[pltpu.VMEM((tile_m_, H), xn_dtype)],   # normalized rows
        ),
        compiler_params=pltpu.CompilerParams(
            # m: independent rows -> megacore-shardable; v: reuses the per-m-tile scratch.
            dimension_semantics=("parallel", "arbitrary"),
            vmem_limit_bytes=vmem_limit,
        ),
        cost_estimate=cost,
    )(x2d, g2d, w)

    if Mp != M or Vp != V:
        # Fallback only: tile selection above avoids padding whenever M / V allow it, so the
        # logits-sized HBM copy implied by this slice normally never happens.
        logits2d = logits2d[:M, :V]
    logits = logits2d.reshape(B, S, V)
    return (logits, labels)


def _reference(hidden_states, norm_weight, o_proj_weight):
    x = hidden_states.astype(jnp.float32)
    var = jnp.mean(x * x, axis=-1, keepdims=True)
    xn = x * lax.rsqrt(var + EPS)
    xn = xn.astype(hidden_states.dtype) * norm_weight
    return jnp.einsum("bsh,vh->bsv", xn, o_proj_weight)


if __name__ == "__main__":
    key = jax.random.PRNGKey(0)
    k_x, k_g, k_w, k_l = jax.random.split(key, 4)

    B, S, H, V = 2, 8, 128, 256  # small, hardware-aligned shapes

    hidden_states = jax.random.normal(k_x, (B, S, H), dtype=jnp.float32)
    norm_weight = 1.0 + 0.01 * jax.random.normal(k_g, (H,), dtype=jnp.float32)
    o_proj_weight = 0.02 * jax.random.normal(k_w, (V, H), dtype=jnp.float32)
    labels = jax.random.randint(k_l, (B, S), 0, V, dtype=jnp.int32)

    ref = _reference(hidden_states, norm_weight, o_proj_weight)

    # 1) Small explicit tiles: exercises the 2D (m, v) grid, the once-per-m-tile norm
    #    scratch reuse, and the chunked-norm path.
    logits, out_labels = fnorm_pipeline_layer(
        hidden_states, norm_weight, o_proj_weight, labels, tile_m=8, tile_v=128
    )
    jax.block_until_ready(logits)
    assert logits.shape == (B, S, V)
    assert jnp.allclose(logits, ref, atol=1e-4, rtol=1e-4), "mismatch vs reference (explicit tiles)"
    assert (out_labels == labels).all()

    # 2) Auto (per-generation) tile selection path.
    logits2, _ = fnorm_pipeline_layer(hidden_states, norm_weight, o_proj_weight, labels)
    jax.block_until_ready(logits2)
    assert jnp.allclose(logits2, ref, atol=1e-4, rtol=1e-4), "mismatch vs reference (auto tiles)"

    print("KERNEL_OK")
</pallas_src>

<mosaic_0001>
module attributes {stable_mosaic.version = 11 : i64} {
  func.func @_fnorm_proj_kernel(%arg0: i32, %arg1: i32, %arg2: memref<8x128xf32, #tpu.memory_space<vmem>>, %arg3: memref<1x128xf32, #tpu.memory_space<vmem>>, %arg4: memref<128x128xf32, #tpu.memory_space<vmem>>, %arg5: memref<8x128xf32, #tpu.memory_space<vmem>>, %arg6: memref<8x128xf32, #tpu.memory_space<vmem>>) attributes {dimension_semantics = [#tpu.dimension_semantics<parallel>, #tpu.dimension_semantics<arbitrary>], iteration_bounds = array<i64: 2, 2>, scalar_prefetch = 0 : i64, scratch_operands = 1 : i64, tpu.core_type = #tpu.core_type<tc>, window_params = [{transform_indices = @transform_0, window_bounds = array<i64: 8, 128>}, {pipeline_mode = #tpu.pipeline_mode<synchronous>, transform_indices = @transform_1, window_bounds = array<i64: 1, 128>}, {transform_indices = @transform_2, window_bounds = array<i64: 128, 128>}, {transform_indices = @transform_3, window_bounds = array<i64: 8, 128>}]} {
    %c0_i32 = arith.constant 0 : i32
    %0 = arith.cmpi eq, %arg1, %c0_i32 : i32
    %1 = arith.extui %0 : i1 to i32
    %c0_i32_0 = arith.constant 0 : i32
    %2 = arith.cmpi ne, %1, %c0_i32_0 : i32
    scf.if %2 {
      %c0_6 = arith.constant 0 : index
      %c0_7 = arith.constant 0 : index
      %7 = vector.load %arg3[%c0_6, %c0_7] : memref<1x128xf32, #tpu.memory_space<vmem>>, vector<1x128xf32>
      %c0_8 = arith.constant 0 : index
      %c0_9 = arith.constant 0 : index
      %8 = vector.load %arg2[%c0_8, %c0_9] : memref<8x128xf32, #tpu.memory_space<vmem>>, vector<8x128xf32>
      %9 = arith.mulf %8, %8 : vector<8x128xf32>
      %cst_10 = arith.constant dense<0.000000e+00> : vector<8xf32>
      %10 = vector.multi_reduction <add>, %9, %cst_10 [1] : vector<8x128xf32> to vector<8xf32>
      %11 = vector.shape_cast %10 : vector<8xf32> to vector<8x1xf32>
      %cst_11 = arith.constant 1.280000e+02 : f32
      %12 = vector.broadcast %cst_11 : f32 to vector<8x1xf32>
      %13 = arith.divf %11, %12 : vector<8x1xf32>
      %cst_12 = arith.constant 9.99999997E-7 : f32
      %14 = vector.broadcast %cst_12 : f32 to vector<8x1xf32>
      %15 = arith.addf %13, %14 : vector<8x1xf32>
      %16 = math.rsqrt %15 : vector<8x1xf32>
      %17 = vector.broadcast %16 : vector<8x1xf32> to vector<8x128xf32>
      %18 = arith.mulf %8, %17 : vector<8x128xf32>
      %19 = vector.broadcast %7 : vector<1x128xf32> to vector<8x128xf32>
      %20 = arith.mulf %18, %19 : vector<8x128xf32>
      %c0_13 = arith.constant 0 : index
      %c0_14 = arith.constant 0 : index
      %21 = vector.load %arg6[%c0_13, %c0_14] : memref<8x128xf32, #tpu.memory_space<vmem>>, vector<8x128xf32>
      tpu.vector_store %arg6[%c0_13, %c0_14], %20 {strides = array<i32>} : memref<8x128xf32, #tpu.memory_space<vmem>>, vector<8x128xf32>,
    } else {
    }
    %c0 = arith.constant 0 : index
    %c0_1 = arith.constant 0 : index
    %3 = vector.load %arg6[%c0, %c0_1] : memref<8x128xf32, #tpu.memory_space<vmem>>, vector<8x128xf32>
    %c0_2 = arith.constant 0 : index
    %c0_3 = arith.constant 0 : index
    %4 = vector.load %arg4[%c0_2, %c0_3] : memref<128x128xf32, #tpu.memory_space<vmem>>, vector<128x128xf32>
    %cst = arith.constant dense<0.000000e+00> : vector<8x128xf32>
    %5 = tpu.matmul %3, %4, %cst {dimension_numbers = #tpu.dot_dimension_numbers<[1], [1], [0], [0], [0, 0, 1, 0], [], []>} : vector<8x128xf32>, vector<128x128xf32>, vector<8x128xf32> -> vector<8x128xf32>
    %c0_4 = arith.constant 0 : index
    %c0_5 = arith.constant 0 : index
    %6 = vector.load %arg5[%c0_4, %c0_5] : memref<8x128xf32, #tpu.memory_space<vmem>>, vector<8x128xf32>
    tpu.vector_store %arg5[%c0_4, %c0_5], %5 {strides = array<i32>} : memref<8x128xf32, #tpu.memory_space<vmem>>, vector<8x128xf32>,
    return
  }
  func.func @transform_0(%arg0: i32, %arg1: i32) -> (i32, i32) {
    %c0_i32 = arith.constant 0 : i32
    %c0_i32_0 = arith.constant 0 : i32
    return %arg0, %c0_i32 : i32, i32
  }
  func.func @transform_1(%arg0: i32, %arg1: i32) -> (i32, i32) {
    %c0_i32 = arith.constant 0 : i32
    %c0_i32_0 = arith.constant 0 : i32
    %c0_i32_1 = arith.constant 0 : i32
    return %c0_i32, %c0_i32_0 : i32, i32
  }
  func.func @transform_2(%arg0: i32, %arg1: i32) -> (i32, i32) {
    %c0_i32 = arith.constant 0 : i32
    %c0_i32_0 = arith.constant 0 : i32
    return %arg1, %c0_i32 : i32, i32
  }
  func.func @transform_3(%arg0: i32, %arg1: i32) -> (i32, i32) {
    %c0_i32 = arith.constant 0 : i32
    return %arg0, %arg1 : i32, i32
  }
}

</mosaic_0001>

<llo_original>
// kernel: tpu_custom_call.1
$region0: #{tpu_custom_call.1}
  #allocation0 [shape = 'u32[]', space=smem, size = 0x4, offset = 0x4, fixed_abs, tag = 'smem constant byte address 0x4 - core index']
  #allocation1 [shape = 'u32[144,128]{1,0:T(1,128)}', space=vmem, size = 0x12000, scoped, tag = 'internal scratch']
  #allocation2 [shape = 'f32[8,128]{1,0:T(8,128)}', space=vmem, size = 0x1000, scoped, tag = 'scratch operand']
  %s0 = inlined_call_operand.hbm [shape: f32[16,128], index: 0, kind: input, shape index: {}]
  %s1 = inlined_call_operand.vmem [shape: f32[1,128], index: 1, kind: input, shape index: {}]
  %s2 = inlined_call_operand.hbm [shape: f32[256,128], index: 2, kind: input, shape index: {}]
  %s3 = inlined_call_operand.hbm [shape: f32[16,256], index: 3, kind: output, shape index: {}]
  %s4 = sld [smem:[#allocation0]]
  $region57: #{tpu_custom_call.1} parent=0
    _
  %s6 = ssub.s32 1, %s4
  %s7 = scalar_select 0, %s6, %s4
  $region1: #{tpu_custom_call.1} parent=0
    #allocation3 [shape = 'u8[8192]{0}', space=vmem, size = 0x2000, scoped, tag = 'input window, operand 0']
    #allocation4 [shape = 's32[2]{0}', space=sflag, size = 0x8, scoped, tag = 'scoped memory for tpu_custom_call.1']
    #allocation5 [shape = 's32[2]{0}', space=sflag, size = 0x8, scoped, tag = 'scoped memory for tpu_custom_call.1']
    #allocation6 [shape = 'u8[131072]{0}', space=vmem, size = 0x20000, scoped, tag = 'input window, operand 2']
    #allocation7 [shape = 's32[2]{0}', space=sflag, size = 0x8, scoped, tag = 'scoped memory for tpu_custom_call.1']
    #allocation8 [shape = 'u8[8192]{0}', space=vmem, size = 0x2000, scoped, tag = 'output window, operand 0']
    %8 = vsyncpa [#allocation4], 0
    %s9 = scalar_lea.sflag [#allocation4], 1
    %10 = vsyncpa %s9, 0
    %11 = vsyncpa [#allocation7], 0
    %s12 = scalar_lea.sflag [#allocation7], 1
    %13 = vsyncpa %s12, 0
    %14 = vsyncpa [#allocation5], 0
    %s15 = scalar_lea.sflag [#allocation5], 1
    %16 = vsyncpa %s15, 0
    loop: start=0, step=1, limit=6
    $region2: #{tpu_custom_call.1} parent=1 // loop_pre_header
      _
    $region3: #{tpu_custom_call.1} parent=1 // loop_header
      %s18 = sphi 0, %s22
      %p19 = scmp.ge.s32.totalorder %s18, 6
      %s25 = sphi 0, %s37
      %s26 = sphi 0, %s33
      %s27 = sphi 0, %s25
      %s28 = sphi 0, %s26
      %s29 = sphi 0, %s27
      %s30 = sphi 0, %s28
      %s40 = sphi 0, %s42
      %s43 = sphi 0, %s40
      %s44 = sphi 0, %s43
      %s60 = sphi 0, %s44
      %s64 = sphi 0, %s64
      %s66 = sphi 0, %s64
      %s67 = sphi 0, %s66
      %s81 = sphi 0, %s67
      %s87 = sphi 0, %s89
      %s90 = sphi 0, %s87
      %s91 = sphi 0, %s90
      %s107 = sphi 0, %s91
      %s115 = sphi 0, %s117
      %s118 = sphi 0, %s115
      %s119 = sphi 0, %s118
      %s135 = sphi 0, %s119
    $region4: #{tpu_custom_call.1} parent=1 // loop_header_branch
      %21 = sbr.rel (%p19) target = $region8
    $region5: #{tpu_custom_call.1} parent=1 // loop_body
      %s23 = ssub.s32 %s18, 1
      %s24 = ssub.s32 %s18, 2
      %s31 = sadd.s32 1, %s26
      %p32 = scmp.ge.s32.totalorder %s31, 2
      %s33 = scalar_select %p32, 0, %s31
      %s34 = sadd.s32 1, %s25
      %s35 = scalar_select %p32, %s34, %s25
      %p36 = scmp.ge.s32.totalorder %s35, 2
      %s37 = scalar_select %p36, 0, %s35
      %s38 = ssub.s32 %s25, %s37
      %p39 = scmp.eq.s32.totalorder %s38, 0
      %s41 = sadd.s32 %s40, 1
      %s42 = scalar_select %p39, %s40, %s41
      %p45 = pneg %p39
      %p46 = scmp.eq.s32.totalorder %s18, 3
      %p47 = por %p45, %p46
      %p48 = scmp.ne.s32.totalorder %s40, %s43
      %p49 = scmp.eq.s32.totalorder %s18, 0
      %p50 = por %p48, %p49
      %p51 = scmp.ne.s32.totalorder %s40, %s43
      %p52 = scmp.eq.s32.totalorder %s23, 3
      %p53 = por %p51, %p52
      %p54 = scmp.ne.s32.totalorder %s43, %s44
      %p55 = scmp.eq.s32.totalorder %s23, 0
      %p56 = por %p54, %p55
      %p57 = scmp.ne.s32.totalorder %s43, %s44
      %p58 = scmp.eq.s32.totalorder %s24, 3
      %p59 = por %p57, %p58
      %p61 = scmp.ne.s32.totalorder %s44, %s60
      %p62 = scmp.eq.s32.totalorder %s24, 0
      %p63 = por %p61, %p62
      %s65 = sadd.s32 %s64, 1
      %p68 = scmp.eq.s32.totalorder %s18, 3
      %p69 = scmp.ne.s32.totalorder %s64, %s66
      %p70 = scmp.eq.s32.totalorder %s18, 0
      %p71 = por %p69, %p70
      %p72 = scmp.ne.s32.totalorder %s64, %s66
      %p73 = scmp.eq.s32.totalorder %s23, 3
      %p74 = por %p72, %p73
      %p75 = scmp.ne.s32.totalorder %s66, %s67
      %p76 = scmp.eq.s32.totalorder %s23, 0
      %p77 = por %p75, %p76
      %p78 = scmp.ne.s32.totalorder %s66, %s67
      %p79 = scmp.eq.s32.totalorder %s24, 3
      %p80 = por %p78, %p79
      %p82 = scmp.ne.s32.totalorder %s67, %s81
      %p83 = scmp.eq.s32.totalorder %s24, 0
      %p84 = por %p82, %p83
      %s85 = ssub.s32 %s26, %s33
      %p86 = scmp.eq.s32.totalorder %s85, 0
      %s88 = sadd.s32 %s87, 1
      %s89 = scalar_select %p86, %s87, %s88
      %p92 = pneg %p86
      %p93 = scmp.eq.s32.totalorder %s18, 3
      %p94 = por %p92, %p93
      %p95 = scmp.ne.s32.totalorder %s87, %s90
      %p96 = scmp.eq.s32.totalorder %s18, 0
      %p97 = por %p95, %p96
      %p98 = scmp.ne.s32.totalorder %s87, %s90
      %p99 = scmp.eq.s32.totalorder %s23, 3
      %p100 = por %p98, %p99
      %p101 = scmp.ne.s32.totalorder %s90, %s91
      %p102 = scmp.eq.s32.totalorder %s23, 0
      %p103 = por %p101, %p102
      %p104 = scmp.ne.s32.totalorder %s90, %s91
      %p105 = scmp.eq.s32.totalorder %s24, 3
      %p106 = por %p104, %p105
      %p108 = scmp.ne.s32.totalorder %s91, %s107
      %p109 = scmp.eq.s32.totalorder %s24, 0
      %p110 = por %p108, %p109
      %s111 = ssub.s32 %s25, %s37
      %s112 = ssub.s32 %s26, %s33
      %s113 = sor.u32 %s111, %s112
      %p114 = scmp.eq.s32.totalorder %s113, 0
      %s116 = sadd.s32 %s115, 1
      %s117 = scalar_select %p114, %s115, %s116
      %p120 = pneg %p114
      %p121 = scmp.eq.s32.totalorder %s18, 3
      %p122 = por %p120, %p121
      %p123 = scmp.ne.s32.totalorder %s115, %s118
      %p124 = scmp.eq.s32.totalorder %s18, 0
      %p125 = por %p123, %p124
      %p126 = scmp.ne.s32.totalorder %s115, %s118
      %p127 = scmp.eq.s32.totalorder %s23, 3
      %p128 = por %p126, %p127
      %p129 = scmp.ne.s32.totalorder %s118, %s119
      %p130 = scmp.eq.s32.totalorder %s23, 0
      %p131 = por %p129, %p130
      %p132 = scmp.ne.s32.totalorder %s118, %s119
      %p133 = scmp.eq.s32.totalorder %s24, 3
      %p134 = por %p132, %p133
      %p136 = scmp.ne.s32.totalorder %s119, %s135
      %p137 = scmp.eq.s32.totalorder %s24, 0
      %p138 = por %p136, %p137
      %p139 = scmp.le.s32.totalorder 1, %s18
      %p140 = scmp.lt.s32.totalorder %s18, 5
      %p141 = pnand %p139, %p140
      %p142 = pneg %p141
      // Predicated region
      $region9: #{tpu_custom_call.1} parent=5 // pred_check
        _
      $region10: #{tpu_custom_call.1} parent=5 // pred_check_branch
        %144 = sbr.rel (%p141) target = $region12
      $region11: #{tpu_custom_call.1} parent=5 // pred_region
        %s145 = ssub.s32 %s18, 1
        // Predicated region
        $region13: #{tpu_custom_call.1} parent=11 // pred_check
          %p146 = pneg %p77
        $region14: #{tpu_custom_call.1} parent=11 // pred_check_branch
          %148 = sbr.rel (%p146) target = $region16
        $region15: #{tpu_custom_call.1} parent=11 // pred_region
          _
        $region16: #{tpu_custom_call.1} parent=11 // pred_fallthru
          _
      $region12: #{tpu_custom_call.1} parent=5 // pred_fallthru
        _
      %p149 = scmp.lt.s32.totalorder %s18, 4
      // Predicated region
      $region17: #{tpu_custom_call.1} parent=5 // pred_check
        %p150 = pneg %p149
      $region18: #{tpu_custom_call.1} parent=5 // pred_check_branch
        %152 = sbr.rel (%p150) target = $region20
      $region19: #{tpu_custom_call.1} parent=5 // pred_region
        // Predicated region
        $region21: #{tpu_custom_call.1} parent=19 // pred_check
          %p153 = pneg %p50
        $region22: #{tpu_custom_call.1} parent=19 // pred_check_branch
          %155 = sbr.rel (%p153) target = $region24
        $region23: #{tpu_custom_call.1} parent=19 // pred_region
          %s156 = sand.u32 %s40, 1
          %s157 = scalar_lea.sflag [#allocation4], %s156
          %s158 = sand.u32 %s40, 1
          %s159 = smul.addr %s158, 8
          %s160 = scalar_lea.vmem [#allocation3], %s159
          %s162 = ssub.s32 128, 128
          %163 = vsyncadd %s157, %s162
          %s164 = smul.addr %s25, 128
          %s165 = scalar_lea.hbm %s0, %s164
          %s167 = sshll.u32 %s160, 4
          %s168 = int_to_ptr.vmem [resolvable:$true] %s167
          %170 = dma.hbm_to_vmem [thread:$0]  %s165, 128, %s168, %s157
        $region24: #{tpu_custom_call.1} parent=19 // pred_fallthru
          _
        // Predicated region
        $region25: #{tpu_custom_call.1} parent=19 // pred_check
          %p171 = pneg %p97
        $region26: #{tpu_custom_call.1} parent=19 // pred_check_branch
          %173 = sbr.rel (%p171) target = $region28
        $region27: #{tpu_custom_call.1} parent=19 // pred_region
          %s174 = sand.u32 %s87, 1
          %s175 = scalar_lea.sflag [#allocation7], %s174
          %s176 = sand.u32 %s87, 1
          %s177 = smul.addr %s176, 128
          %s178 = scalar_lea.vmem [#allocation6], %s177
          %s179 = smul.u32 16, %s26
          %s181 = ssub.s32 2048, 2048
          %182 = vsyncadd %s175, %s181
          %s183 = smul.addr %s179, 128
          %s184 = scalar_lea.hbm %s2, %s183
          %s185 = sshll.u32 %s178, 4
          %s186 = int_to_ptr.vmem [resolvable:$true] %s185
          %191 = dma.hbm_to_vmem [thread:$0]  %s184, 2048, %s186, %s175, 128, 128, 8
        $region28: #{tpu_custom_call.1} parent=19 // pred_fallthru
          _
      $region20: #{tpu_custom_call.1} parent=5 // pred_fallthru
        _
      %p192 = scmp.le.s32.totalorder 1, %s18
      %p193 = scmp.lt.s32.totalorder %s18, 5
      %p194 = pnand %p192, %p193
      %p195 = pneg %p194
      // Predicated region
      $region29: #{tpu_custom_call.1} parent=5 // pred_check
        _
      $region30: #{tpu_custom_call.1} parent=5 // pred_check_branch
        %197 = sbr.rel (%p194) target = $region32
      $region31: #{tpu_custom_call.1} parent=5 // pred_region
        %s198 = ssub.s32 %s18, 1
        %s199 = sand.u32 %s43, 1
        %s200 = scalar_lea.sflag [#allocation4], %s199
        %s201 = sand.u32 %s43, 1
        %s202 = smul.addr %s201, 8
        %s203 = scalar_lea.vmem [#allocation3], %s202
        // Predicated region
        $region33: #{tpu_custom_call.1} parent=31 // pred_check
          %p204 = pneg %p56
        $region34: #{tpu_custom_call.1} parent=31 // pred_check_branch
          %206 = sbr.rel (%p204) target = $region36
        $region35: #{tpu_custom_call.1} parent=31 // pred_region
          %207 = dma.done %s200, 128
        $region36: #{tpu_custom_call.1} parent=31 // pred_fallthru
          _
        %s208 = sand.u32 %s90, 1
        %s209 = scalar_lea.sflag [#allocation7], %s208
        %s210 = sand.u32 %s90, 1
        %s211 = smul.addr %s210, 128
        %s212 = scalar_lea.vmem [#allocation6], %s211
        // Predicated region
        $region37: #{tpu_custom_call.1} parent=31 // pred_check
          %p213 = pneg %p103
        $region38: #{tpu_custom_call.1} parent=31 // pred_check_branch
          %215 = sbr.rel (%p213) target = $region40
        $region39: #{tpu_custom_call.1} parent=31 // pred_region
          %216 = dma.done %s209, 2048
        $region40: #{tpu_custom_call.1} parent=31 // pred_fallthru
          _
        %s217 = sand.u32 %s43, 1
        %s218 = scalar_lea.sflag [#allocation4], %s217
        %s219 = sand.u32 %s43, 1
        %s220 = smul.addr %s219, 8
        %s221 = scalar_lea.vmem [#allocation3], %s220
        %p222 = pneg %p56
        %p223 = pneg %p53
        %p224 = pneg %p77
        %p225 = pneg %p74
        %s226 = sand.u32 %s90, 1
        %s227 = scalar_lea.sflag [#allocation7], %s226
        %s228 = sand.u32 %s90, 1
        %s229 = smul.addr %s228, 128
        %s230 = scalar_lea.vmem [#allocation6], %s229
        %p231 = pneg %p103
        %p232 = pneg %p100
        %p233 = pneg %p131
        %p234 = pneg %p128
        %s235 = sand.u32 %s118, 1
        %s236 = scalar_lea.sflag [#allocation5], %s235
        %s237 = sand.u32 %s118, 1
        %s238 = smul.addr %s237, 8
        %s239 = scalar_lea.vmem [#allocation8], %s238
        %s240 = smul.u32 16, %s28
        %p241 = scmp.eq.s32.totalorder %s28, 0
        // Predicated region
        $region41: #{tpu_custom_call.1} parent=31 // pred_check
          %p242 = pneg %p241
        $region42: #{tpu_custom_call.1} parent=31 // pred_check_branch
          %244 = sbr.rel (%p242) target = $region44
        $region43: #{tpu_custom_call.1} parent=31 // pred_region
          %v245 = vld [vmem:[%s1] sm:$0x1]
          %v246 = vld [vmem:[%s203] sm:$0xff]
          %v247 = vmul.f32 %v246, %v246
          %248 = vadd.xlane.f32.xlu0 %v247
          %v249 = vpop.xlane.xlu0 %248
          %v250 = vrcp.pop 128.0
          %v251 = vmul.f32 %v249, %v250
          %v252 = vadd.f32 %v251, 1e-06
          %v253 = vrsqrt.pop %v252
          %v254 = vmul.f32 %v246, %v253
          %v256 = vlaneseq
          %v257 = vshrl.u32 %v256, 7
          %v258 = vsub.s32 0, %v257
          %v259 = vrot.slane %v245, %v258
          %v261 = vmul.f32 %v254, %v259
          %262 = vst [vmem:[#allocation2] sm:$0xff] %v261
        $region44: #{tpu_custom_call.1} parent=31 // pred_fallthru
          _
        %v263 = vld [vmem:[#allocation2] sm:$0xff]
        %v264 = vld [vmem:[%s212] sm:$0xff]
        %v265 = vld [vmem:[%s212 + $0x8] sm:$0xff]
        %v266 = vld [vmem:[%s212 + $0x10] sm:$0xff]
        %v267 = vld [vmem:[%s212 + $0x18] sm:$0xff]
        %v268 = vld [vmem:[%s212 + $0x20] sm:$0xff]
        %v269 = vld [vmem:[%s212 + $0x28] sm:$0xff]
        %v270 = vld [vmem:[%s212 + $0x30] sm:$0xff]
        %v271 = vld [vmem:[%s212 + $0x38] sm:$0xff]
        %v272 = vld [vmem:[%s212 + $0x40] sm:$0xff]
        %v273 = vld [vmem:[%s212 + $0x48] sm:$0xff]
        %v274 = vld [vmem:[%s212 + $0x50] sm:$0xff]
        %v275 = vld [vmem:[%s212 + $0x58] sm:$0xff]
        %v276 = vld [vmem:[%s212 + $0x60] sm:$0xff]
        %v277 = vld [vmem:[%s212 + $0x68] sm:$0xff]
        %v278 = vld [vmem:[%s212 + $0x70] sm:$0xff]
        %v279 = vld [vmem:[%s212 + $0x78] sm:$0xff]
        %280 = vmatprep.subr.mxu0 0.0
        %281 = vmatpush1.xpose.msra.mxu0 %v279
        %282 = vmatprep.subr.mxu0 0.0
        %283 = vmatpush1.xpose.msra.mxu0 %v278
        %284 = vmatprep.subr.mxu0 0.0
        %285 = vmatpush1.xpose.msra.mxu0 %v277
        %286 = vmatprep.subr.mxu0 0.0
        %287 = vmatpush1.xpose.msra.mxu0 %v276
        %288 = vmatprep.subr.mxu0 0.0
        %289 = vmatpush1.xpose.msra.mxu0 %v275
        %290 = vmatprep.subr.mxu0 0.0
        %291 = vmatpush1.xpose.msra.mxu0 %v274
        %292 = vmatprep.subr.mxu0 0.0
        %293 = vmatpush1.xpose.msra.mxu0 %v273
        %294 = vmatprep.subr.mxu0 0.0
        %295 = vmatpush1.xpose.msra.mxu0 %v272
        %296 = vmatprep.subr.mxu0 0.0
        %297 = vmatpush1.xpose.msra.mxu0 %v271
        %298 = vmatprep.subr.mxu0 0.0
        %299 = vmatpush1.xpose.msra.mxu0 %v270
        %300 = vmatprep.subr.mxu0 0.0
        %301 = vmatpush1.xpose.msra.mxu0 %v269
        %302 = vmatprep.subr.mxu0 0.0
        %303 = vmatpush1.xpose.msra.mxu0 %v268
        %304 = vmatprep.subr.mxu0 0.0
        %305 = vmatpush1.xpose.msra.mxu0 %v267
        %306 = vmatprep.subr.mxu0 0.0
        %307 = vmatpush1.xpose.msra.mxu0 %v266
        %308 = vmatprep.subr.mxu0 0.0
        %309 = vmatpush1.xpose.msra.mxu0 %v265
        %310 = vmatprep.subr.mxu0 0.0
        %311 = vmatpush1.xpose.msra.mxu0 %v264
        %312 = vmatprep.subr.mxu0 0.0
        %313 = vmatpush2.xpose.msra.mxu0 0.0
        %314 = vmatprep.subr.mxu0 0.0
        %315 = vmatpush2.xpose.msra.mxu0 0.0
        %316 = vmatprep.subr.mxu0 0.0
        %317 = vmatpush2.xpose.msra.mxu0 0.0
        %318 = vmatprep.subr.mxu0 0.0
        %319 = vmatpush2.xpose.msra.mxu0 0.0
        %320 = vmatprep.subr.mxu0 0.0
        %321 = vmatpush2.xpose.msra.mxu0 0.0
        %322 = vmatprep.subr.mxu0 0.0
        %323 = vmatpush2.xpose.msra.mxu0 0.0
        %324 = vmatprep.subr.mxu0 0.0
        %325 = vmatpush2.xpose.msra.mxu0 0.0
        %326 = vmatprep.subr.mxu0 0.0
        %327 = vmatpush2.xpose.msra.mxu0 0.0
        %328 = vmatprep.subr.mxu0 0.0
        %329 = vmatpush2.xpose.msra.mxu0 0.0
        %330 = vmatprep.subr.mxu0 0.0
        %331 = vmatpush2.xpose.msra.mxu0 0.0
        %332 = vmatprep.subr.mxu0 0.0
        %333 = vmatpush2.xpose.msra.mxu0 0.0
        %334 = vmatprep.subr.mxu0 0.0
        %335 = vmatpush2.xpose.msra.mxu0 0.0
        %336 = vmatprep.subr.mxu0 0.0
        %337 = vmatpush2.xpose.msra.mxu0 0.0
        %338 = vmatprep.subr.mxu0 0.0
        %339 = vmatpush2.xpose.msra.mxu0 0.0
        %340 = vmatprep.subr.mxu0 0.0
        %341 = vmatpush2.xpose.msra.mxu0 0.0
        %342 = vmatprep.subr.mxu0 0.0
        %343 = vmatpush2.xpose.msra.mxu0 0.0
        %344 = vmatprep.mubr.f32.mxu0 0.0
        %345 = vmatmul.mubr.f32.gmra.mxu0 %v263
        %v346 = vpop.f32.mrf.mxu0
        %v347 = vadd.f32 0.0, %v346
        %v348 = vpop.f32.mrf.mxu0
        %349 = vdwg.mxu0
        %350 = vst [vmem:[%s239] sm:$0xff] %v347
        %s351 = sand.u32 %s118, 1
        %s352 = scalar_lea.sflag [#allocation5], %s351
        %s353 = sand.u32 %s118, 1
        %s354 = smul.addr %s353, 8
        %s355 = scalar_lea.vmem [#allocation8], %s354
        // Predicated region
        $region45: #{tpu_custom_call.1} parent=31 // pred_check
          %p356 = pneg %p128
        $region46: #{tpu_custom_call.1} parent=31 // pred_check_branch
          %358 = sbr.rel (%p356) target = $region48
        $region47: #{tpu_custom_call.1} parent=31 // pred_region
          %s360 = ssub.s32 128, 128
          %361 = vsyncadd %s352, %s360
          %s362 = smul.addr %s27, 2
          %s363 = sadd.s32 %s28, %s362
          %s364 = smul.addr %s363, 128
          %s365 = scalar_lea.hbm %s3, %s364
          %s367 = sshll.u32 %s355, 4
          %s368 = int_to_ptr.vmem [resolvable:$true] %s367
          %370 = dma.vmem_to_hbm [thread:$0]  %s368, 128, %s365, %s352
        $region48: #{tpu_custom_call.1} parent=31 // pred_fallthru
          _
      $region32: #{tpu_custom_call.1} parent=5 // pred_fallthru
        _
      %p371 = scmp.le.s32.totalorder 2, %s18
      // Predicated region
      $region49: #{tpu_custom_call.1} parent=5 // pred_check
        %p372 = pneg %p371
      $region50: #{tpu_custom_call.1} parent=5 // pred_check_branch
        %374 = sbr.rel (%p372) target = $region52
      $region51: #{tpu_custom_call.1} parent=5 // pred_region
        %s375 = ssub.s32 %s18, 2
        // Predicated region
        $region53: #{tpu_custom_call.1} parent=51 // pred_check
          %p376 = pneg %p134
        $region54: #{tpu_custom_call.1} parent=51 // pred_check_branch
          %378 = sbr.rel (%p376) target = $region56
        $region55: #{tpu_custom_call.1} parent=51 // pred_region
          %s379 = sand.u32 %s119, 1
          %s380 = scalar_lea.sflag [#allocation5], %s379
          %s381 = sand.u32 %s119, 1
          %s382 = smul.addr %s381, 8
          %s383 = scalar_lea.vmem [#allocation8], %s382
          %384 = dma.done %s380, 128
        $region56: #{tpu_custom_call.1} parent=51 // pred_fallthru
          _
      $region52: #{tpu_custom_call.1} parent=5 // pred_fallthru
        _
    $region6: #{tpu_custom_call.1} parent=1 // loop_footer
      %s22 = sadd.s32 1, %s18
    $region7: #{tpu_custom_call.1} parent=1 // loop_footer_branch
      %17 = sbr.rel target = $region3
    $region8: #{tpu_custom_call.1} parent=1 // loop_exit
      _
    %385 = vsyncpa [#allocation4], 1
    %s386 = scalar_lea.sflag [#allocation4], 1
    %387 = vsyncpa %s386, 1
    %388 = vsyncpa [#allocation7], 1
    %s389 = scalar_lea.sflag [#allocation7], 1
    %390 = vsyncpa %s389, 1
    %391 = vsyncpa [#allocation5], 1
    %s392 = scalar_lea.sflag [#allocation5], 1
    %393 = vsyncpa %s392, 1

</llo_original>
